<compile_context>
chip_gen: v5e
topology: v5e:2x2
jax: 0.10.0
libtpu: 0.0.40
codegen_flags: <defaults>
</compile_context>

<pallas_src>
import functools
import math

import jax
import jax.numpy as jnp
from jax.experimental import pallas as pl
from jax.experimental.pallas import tpu as pltpu  # noqa: F401  (TPU backend)


def _full_spec(shape):
    nd = len(shape)
    return pl.BlockSpec(shape, lambda i, _nd=nd: (0,) * _nd)


# ---------------------------------------------------------------------------
# Kernel: embedding gather (one-hot MXU dot) + fused QKV projection +
# multi-head attention + fused output linear.  Everything is tiny and lives
# in VMEM; grid=(1,).
# ---------------------------------------------------------------------------
def coreg_fused_kernel(idx_ref, tbl_ref, wqkv_ref, bqkv_ref, hmask_ref,
                       gbias_ref, wfin_ref, bfin_ref, out_ref,
                       *, num_heads, attention_dim):
    A = attention_dim
    H = num_heads

    # Embedding lookup as an exact one-hot matmul (table is tiny: (T, D)).
    idx = idx_ref[...]                                   # (M, 1) int32
    tbl = tbl_ref[...]                                   # (T, D) f32
    M = idx.shape[0]
    T = tbl.shape[0]
    onehot = (idx == jax.lax.broadcasted_iota(jnp.int32, (M, T), 1))
    emb = jnp.dot(onehot.astype(jnp.float32), tbl,
                  preferred_element_type=jnp.float32)    # (M, D)

    # Fused QKV: one (M, D) @ (D, 3A) MXU dot (mlp_head ∘ in_proj pre-folded).
    qkv = (jnp.dot(emb, wqkv_ref[...], preferred_element_type=jnp.float32)
           + bqkv_ref[...])                              # (M, 3A)
    q = qkv[:, 0 * A:1 * A]                              # already scaled by 1/sqrt(hd)
    k = qkv[:, 1 * A:2 * A]
    v = qkv[:, 2 * A:3 * A]

    # Stack queries per head along the sublane axis, masking each replica to
    # its own head's columns; one dot then yields all per-head scores at once.
    hm = hmask_ref[...]                                  # (H, 1, A) 0/1 f32
    q_stk = (q[None, :, :] * hm).reshape(H * M, A)       # (H*M, A)

    scores = jax.lax.dot_general(q_stk, k, (((1,), (1,)), ((), ())),
                                 preferred_element_type=jnp.float32)   # (H*M, M)
    scores = scores + gbias_ref[...]                     # block-diagonal group bias
    scores = scores - jnp.max(scores, axis=-1, keepdims=True)
    p = jnp.exp(scores)
    p = p * pl.reciprocal(jnp.sum(p, axis=-1, keepdims=True), approx=True)

    ctx_stk = jnp.dot(p, v, preferred_element_type=jnp.float32)        # (H*M, A)
    ctx = jnp.sum(ctx_stk.reshape(H, M, A) * hm, axis=0)               # (M, A)

    # Fused MHA out_proj (∘ final proj when decorrelate=False).
    out_ref[...] = (jnp.dot(ctx, wfin_ref[...], preferred_element_type=jnp.float32)
                    + bfin_ref[...])


def coreg_fused_attention(idx2d, fused, num_heads):
    M = idx2d.shape[0]
    A = fused["w_qkv"].shape[1] // 3
    O = fused["w_final"].shape[1]
    assert fused["group_bias"].shape == (num_heads * M, M), \
        "fused params were prepared for a different batch/seq size"
    args = [idx2d, fused["embedding"], fused["w_qkv"], fused["b_qkv"],
            fused["head_mask"], fused["group_bias"],
            fused["w_final"], fused["b_final"]]
    kernel = functools.partial(coreg_fused_kernel,
                               num_heads=num_heads, attention_dim=A)
    return pl.pallas_call(
        kernel,
        out_shape=jax.ShapeDtypeStruct((M, O), jnp.float32),
        grid=(1,),
        in_specs=[_full_spec(a.shape) for a in args],
        out_specs=_full_spec((M, O)),
    )(*args)


# ---------------------------------------------------------------------------
# Small linear kernel — only used on the decorrelate=True path (proj after SVD).
# ---------------------------------------------------------------------------
def linear_kernel(x_ref, wT_ref, b_ref, o_ref):
    o_ref[...] = (jnp.dot(x_ref[...], wT_ref[...], preferred_element_type=jnp.float32)
                  + b_ref[...])


def pallas_linear(x, wT, b_row):
    M = x.shape[0]
    O = wT.shape[1]
    args = [x, wT, b_row]
    return pl.pallas_call(
        linear_kernel,
        out_shape=jax.ShapeDtypeStruct((M, O), jnp.float32),
        grid=(1,),
        in_specs=[_full_spec(a.shape) for a in args],
        out_specs=_full_spec((M, O)),
    )(*args)


# ---------------------------------------------------------------------------
# One-time parameter fusion / packing (NOT done per forward call).
# ---------------------------------------------------------------------------
def prepare_fused_params(params, *, num_heads, batch, seq, decorrelate):
    A = params["w_out"].shape[0]
    hd = A // num_heads
    scale = 1.0 / math.sqrt(hd)

    Wi, bi = params["in_proj_w"], params["in_proj_b"]

    def fuse(w1, b1, w2, b2):
        # (x @ w1.T + b1) @ w2.T + b2  ==  x @ Wf + bf
        return w1.T @ w2.T, b1 @ w2.T + b2

    wq_f, bq_f = fuse(params["wq"], params["bq"], Wi[0 * A:1 * A], bi[0 * A:1 * A])
    wk_f, bk_f = fuse(params["wk"], params["bk"], Wi[1 * A:2 * A], bi[1 * A:2 * A])
    wv_f, bv_f = fuse(params["wv"], params["bv"], Wi[2 * A:3 * A], bi[2 * A:3 * A])
    wq_f, bq_f = wq_f * scale, bq_f * scale          # fold 1/sqrt(head_dim) into q

    w_qkv = jnp.concatenate([wq_f, wk_f, wv_f], axis=1).astype(jnp.float32)   # (D, 3A)
    b_qkv = jnp.concatenate([bq_f, bk_f, bv_f])[None, :].astype(jnp.float32)  # (1, 3A)

    if decorrelate:
        # Keep out_proj separate so decorrelation sees the true attention output.
        w_fin = params["w_out"].T.astype(jnp.float32)                 # (A, A)
        b_fin = params["b_out"][None, :].astype(jnp.float32)
    else:
        w_fin, b_fin = fuse(params["w_out"], params["b_out"],
                            params["w_proj"], params["b_proj"])       # (A, D)
        w_fin = w_fin.astype(jnp.float32)
        b_fin = b_fin[None, :].astype(jnp.float32)

    # Per-head 0/1 column mask, (H, 1, A).
    head_mask = (jnp.arange(A, dtype=jnp.int32)[None, :] // hd
                 == jnp.arange(num_heads, dtype=jnp.int32)[:, None])
    head_mask = head_mask.astype(jnp.float32)[:, None, :]

    # Additive group bias for the head-stacked scores, (H*M, M): row h*M+i may
    # attend to column j iff they share the same virtual-token column s.
    M = batch * seq
    qi = (jnp.arange(num_heads * M, dtype=jnp.int32) % M) % seq
    kj = jnp.arange(M, dtype=jnp.int32) % seq
    group_bias = jnp.where(qi[:, None] == kj[None, :], 0.0, -1e30).astype(jnp.float32)

    return {
        "embedding": params["embedding"].astype(jnp.float32),
        "w_qkv": w_qkv, "b_qkv": b_qkv,
        "head_mask": head_mask, "group_bias": group_bias,
        "w_final": w_fin, "b_final": b_fin,
        # Only used on the decorrelate=True path.
        "w_projT": params["w_proj"].T.astype(jnp.float32),
        "b_proj_row": params["b_proj"][None, :].astype(jnp.float32),
    }


# ---------------------------------------------------------------------------
# decorrelate_heads2 — SVD whitening, plain JAX (only when decorrelate=True)
# ---------------------------------------------------------------------------
def decorrelate_heads2_jax(attention_output, decorrelate_lambda):
    # TODO(synk): torch.linalg.svd has no Pallas TPU equivalent; kept in plain JAX.
    l = decorrelate_lambda
    B, S, E = attention_output.shape
    x = attention_output.reshape(B * S, E)
    mean = jnp.mean(x, axis=0, keepdims=True)
    xc = x - mean
    _, sv, vh = jnp.linalg.svd(xc, full_matrices=False)
    reduced = xc @ vh.T
    scaled = reduced * (1.0 / jnp.sqrt(sv + 1e-5))[None, :]
    whitened = scaled @ vh
    return (1.0 - l) * attention_output + l * whitened.reshape(B, S, E)


# ---------------------------------------------------------------------------
# Forward wrapper.  `fused` must have been prepared with the same `decorrelate`
# flag; the embedding gather happens INSIDE the fused kernel.
# ---------------------------------------------------------------------------
def coreg_prompt_embedding_forward(fused, indices, *, num_heads,
                                   decorrelate=False, decorrelate_lambda=0.1):
    B, S = indices.shape
    D = fused["embedding"].shape[-1]
    M = B * S
    idx2d = indices.reshape(M, 1).astype(jnp.int32)     # index column for in-kernel gather

    y = coreg_fused_attention(idx2d, fused, num_heads)  # (M, D) or (M, A)

    if decorrelate:
        A = y.shape[-1]
        y = decorrelate_heads2_jax(y.reshape(B, S, A), decorrelate_lambda)
        y = pallas_linear(y.reshape(M, A), fused["w_projT"], fused["b_proj_row"])

    return y.reshape(B, S, D)


# ---------------------------------------------------------------------------
# Unfused pure-JAX reference of the PyTorch module (eval mode, decorrelate=False)
# ---------------------------------------------------------------------------
def reference_forward(params, indices, *, num_heads):
    B, S = indices.shape
    emb = params["embedding"][indices].astype(jnp.float32)      # (B, S, D)
    lin = lambda x, w, b: x @ w.T + b
    q = lin(emb, params["wq"], params["bq"])
    k = lin(emb, params["wk"], params["bk"])
    v = lin(emb, params["wv"], params["bv"])
    A = q.shape[-1]
    hd = A // num_heads
    Wi, bi = params["in_proj_w"], params["in_proj_b"]
    qp = lin(q, Wi[:A], bi[:A]) / math.sqrt(hd)
    kp = lin(k, Wi[A:2 * A], bi[A:2 * A])
    vp = lin(v, Wi[2 * A:], bi[2 * A:])
    # batch_first=False: MHA batch axis is S, attended sequence axis is B.
    split = lambda x: x.reshape(B, S, num_heads, hd).transpose(1, 2, 0, 3)  # (S,H,B,hd)
    qh, kh, vh = split(qp), split(kp), split(vp)
    sc = jnp.einsum('shbd,shcd->shbc', qh, kh)
    p = jax.nn.softmax(sc, axis=-1)
    ctx = jnp.einsum('shbc,shcd->shbd', p, vh).transpose(2, 0, 1, 3).reshape(B, S, A)
    y = lin(ctx, params["w_out"], params["b_out"])
    return lin(y, params["w_proj"], params["b_proj"])           # (B, S, D)


# ---------------------------------------------------------------------------
# Deterministic raw parameters (shapes from the module's __init__)
# ---------------------------------------------------------------------------
def init_params(key, total_virtual_tokens, token_dim, attention_dim):
    D, A = token_dim, attention_dim
    ks = jax.random.split(key, 13)
    nrm = lambda k, shp, s=0.1: (s * jax.random.normal(k, shp)).astype(jnp.float32)
    return {
        "embedding": jax.random.normal(ks[0], (total_virtual_tokens, D)).astype(jnp.float32),
        # mlp_head_{k,q,v}: Linear(D -> A)
        "wk": nrm(ks[1], (A, D)), "bk": nrm(ks[2], (A,)),
        "wq": nrm(ks[3], (A, D)), "bq": nrm(ks[4], (A,)),
        "wv": nrm(ks[5], (A, D)), "bv": nrm(ks[6], (A,)),
        # MultiheadAttention in_proj (stacked q/k/v) and out_proj
        "in_proj_w": nrm(ks[7], (3 * A, A)), "in_proj_b": nrm(ks[8], (3 * A,)),
        "w_out": nrm(ks[9], (A, A)), "b_out": nrm(ks[10], (A,)),
        # proj: Linear(A -> D)
        "w_proj": nrm(ks[11], (D, A)), "b_proj": nrm(ks[12], (D,)),
    }


if __name__ == "__main__":
    # Config: token_dim=32, attention_dim=32, num_views (heads)=4,
    # num_virtual_tokens=8, num_transformer_submodules=1, decorrelate=False.
    token_dim = 32
    attention_dim = 32
    num_views = 4
    num_virtual_tokens = 8
    num_transformer_submodules = 1
    total_virtual_tokens = num_virtual_tokens * num_transformer_submodules
    batch = 2

    key = jax.random.PRNGKey(0)
    k_params, k_idx = jax.random.split(key)
    params = init_params(k_params, total_virtual_tokens, token_dim, attention_dim)
    indices = jax.random.randint(k_idx, (batch, total_virtual_tokens),
                                 0, total_virtual_tokens, dtype=jnp.int32)

    # One-time fusion/packing of parameters (no per-call transposes).
    fused = prepare_fused_params(params, num_heads=num_views,
                                 batch=batch, seq=total_virtual_tokens,
                                 decorrelate=False)

    fwd = jax.jit(functools.partial(coreg_prompt_embedding_forward,
                                    num_heads=num_views,
                                    decorrelate=False,
                                    decorrelate_lambda=0.1))
    out = fwd(fused, indices)
    jax.block_until_ready(out)

    assert out.shape == (batch, total_virtual_tokens, token_dim)
    assert out.dtype == jnp.float32

    # Numerical check against the unfused reference (weight fusions reassociate
    # f32 matmuls and the softmax uses an approximate reciprocal -> loose tol).
    ref = reference_forward(params, indices, num_heads=num_views)
    max_err = float(jnp.max(jnp.abs(out - ref)))
    assert max_err < 5e-2, f"kernel/reference mismatch: max abs err {max_err}"

    print("KERNEL_OK")
</pallas_src>

<mosaic_0001>
module attributes {stable_mosaic.version = 11 : i64} {
  func.func @coreg_fused_kernel(%arg0: i32, %arg1: memref<16x1xi32, #tpu.memory_space<vmem>>, %arg2: memref<8x32xf32, #tpu.memory_space<vmem>>, %arg3: memref<32x96xf32, #tpu.memory_space<vmem>>, %arg4: memref<1x96xf32, #tpu.memory_space<vmem>>, %arg5: memref<4x1x32xf32, #tpu.memory_space<vmem>>, %arg6: memref<64x16xf32, #tpu.memory_space<vmem>>, %arg7: memref<32x32xf32, #tpu.memory_space<vmem>>, %arg8: memref<1x32xf32, #tpu.memory_space<vmem>>, %arg9: memref<16x32xf32, #tpu.memory_space<vmem>>) attributes {dimension_semantics = [#tpu.dimension_semantics<arbitrary>], iteration_bounds = array<i64: 1>, scalar_prefetch = 0 : i64, scratch_operands = 0 : i64, tpu.core_type = #tpu.core_type<tc>, window_params = [{pipeline_mode = #tpu.pipeline_mode<synchronous>, transform_indices = @transform_0, window_bounds = array<i64: 16, 1>}, {pipeline_mode = #tpu.pipeline_mode<synchronous>, transform_indices = @transform_1, window_bounds = array<i64: 8, 32>}, {pipeline_mode = #tpu.pipeline_mode<synchronous>, transform_indices = @transform_2, window_bounds = array<i64: 32, 96>}, {pipeline_mode = #tpu.pipeline_mode<synchronous>, transform_indices = @transform_3, window_bounds = array<i64: 1, 96>}, {pipeline_mode = #tpu.pipeline_mode<synchronous>, transform_indices = @transform_4, window_bounds = array<i64: 4, 1, 32>}, {pipeline_mode = #tpu.pipeline_mode<synchronous>, transform_indices = @transform_5, window_bounds = array<i64: 64, 16>}, {pipeline_mode = #tpu.pipeline_mode<synchronous>, transform_indices = @transform_6, window_bounds = array<i64: 32, 32>}, {pipeline_mode = #tpu.pipeline_mode<synchronous>, transform_indices = @transform_7, window_bounds = array<i64: 1, 32>}, {pipeline_mode = #tpu.pipeline_mode<synchronous>, transform_indices = @transform_8, window_bounds = array<i64: 16, 32>}]} {
    %c0 = arith.constant 0 : index
    %c0_0 = arith.constant 0 : index
    %0 = vector.load %arg1[%c0, %c0_0] : memref<16x1xi32, #tpu.memory_space<vmem>>, vector<16x1xi32>
    %c0_1 = arith.constant 0 : index
    %c0_2 = arith.constant 0 : index
    %1 = vector.load %arg2[%c0_1, %c0_2] : memref<8x32xf32, #tpu.memory_space<vmem>>, vector<8x32xf32>
    %2 = tpu.iota {dimensions = array<i32: 1>} : vector<16x8xi32>
    %3 = vector.broadcast %0 : vector<16x1xi32> to vector<16x8xi32>
    %4 = arith.cmpi eq, %3, %2 : vector<16x8xi32>
    %5 = arith.extui %4 : vector<16x8xi1> to vector<16x8xi32>
    %6 = arith.sitofp %5 : vector<16x8xi32> to vector<16x8xf32>
    %cst = arith.constant dense<0.000000e+00> : vector<16x32xf32>
    %7 = tpu.matmul %6, %1, %cst {dimension_numbers = #tpu.dot_dimension_numbers<[1], [0], [0], [1], [0, 0, 1, 1], [], []>} : vector<16x8xf32>, vector<8x32xf32>, vector<16x32xf32> -> vector<16x32xf32>
    %c0_3 = arith.constant 0 : index
    %c0_4 = arith.constant 0 : index
    %8 = vector.load %arg3[%c0_3, %c0_4] : memref<32x96xf32, #tpu.memory_space<vmem>>, vector<32x96xf32>
    %cst_5 = arith.constant dense<0.000000e+00> : vector<16x96xf32>
    %9 = tpu.matmul %7, %8, %cst_5 {dimension_numbers = #tpu.dot_dimension_numbers<[1], [0], [0], [1], [0, 0, 1, 1], [], []>} : vector<16x32xf32>, vector<32x96xf32>, vector<16x96xf32> -> vector<16x96xf32>
    %c0_6 = arith.constant 0 : index
    %c0_7 = arith.constant 0 : index
    %10 = vector.load %arg4[%c0_6, %c0_7] : memref<1x96xf32, #tpu.memory_space<vmem>>, vector<1x96xf32>
    %11 = vector.broadcast %10 : vector<1x96xf32> to vector<16x96xf32>
    %12 = arith.addf %9, %11 : vector<16x96xf32>
    %13 = vector.extract_strided_slice %12 {offsets = [0, 0], sizes = [16, 32], strides = [1, 1]} : vector<16x96xf32> to vector<16x32xf32>
    %14 = vector.extract_strided_slice %12 {offsets = [0, 32], sizes = [16, 32], strides = [1, 1]} : vector<16x96xf32> to vector<16x32xf32>
    %15 = vector.extract_strided_slice %12 {offsets = [0, 64], sizes = [16, 32], strides = [1, 1]} : vector<16x96xf32> to vector<16x32xf32>
    %c0_8 = arith.constant 0 : index
    %c0_9 = arith.constant 0 : index
    %c0_10 = arith.constant 0 : index
    %16 = vector.load %arg5[%c0_8, %c0_9, %c0_10] : memref<4x1x32xf32, #tpu.memory_space<vmem>>, vector<4x1x32xf32>
    %17 = vector.shape_cast %13 : vector<16x32xf32> to vector<1x16x32xf32>
    %18 = vector.broadcast %17 : vector<1x16x32xf32> to vector<4x16x32xf32>
    %19 = vector.broadcast %16 : vector<4x1x32xf32> to vector<4x16x32xf32>
    %20 = arith.mulf %18, %19 : vector<4x16x32xf32>
    %21 = vector.shape_cast %20 : vector<4x16x32xf32> to vector<64x32xf32>
    %cst_11 = arith.constant dense<0.000000e+00> : vector<64x16xf32>
    %22 = tpu.matmul %21, %14, %cst_11 {dimension_numbers = #tpu.dot_dimension_numbers<[1], [1], [0], [0], [0, 0, 1, 0], [], []>} : vector<64x32xf32>, vector<16x32xf32>, vector<64x16xf32> -> vector<64x16xf32>
    %c0_12 = arith.constant 0 : index
    %c0_13 = arith.constant 0 : index
    %23 = vector.load %arg6[%c0_12, %c0_13] : memref<64x16xf32, #tpu.memory_space<vmem>>, vector<64x16xf32>
    %24 = arith.addf %22, %23 : vector<64x16xf32>
    %cst_14 = arith.constant dense<0xFF800000> : vector<64xf32>
    %25 = vector.multi_reduction <maximumf>, %24, %cst_14 [1] : vector<64x16xf32> to vector<64xf32>
    %26 = vector.shape_cast %25 : vector<64xf32> to vector<64x1xf32>
    %27 = vector.broadcast %26 : vector<64x1xf32> to vector<64x16xf32>
    %28 = arith.subf %24, %27 : vector<64x16xf32>
    %29 = math.exp %28 : vector<64x16xf32>
    %cst_15 = arith.constant dense<0.000000e+00> : vector<64xf32>
    %30 = vector.multi_reduction <add>, %29, %cst_15 [1] : vector<64x16xf32> to vector<64xf32>
    %31 = vector.shape_cast %30 : vector<64xf32> to vector<64x1xf32>
    %32 = tpu.reciprocal %31 {approx = true} : vector<64x1xf32> -> vector<64x1xf32>
    %33 = vector.broadcast %32 : vector<64x1xf32> to vector<64x16xf32>
    %34 = arith.mulf %29, %33 : vector<64x16xf32>
    %cst_16 = arith.constant dense<0.000000e+00> : vector<64x32xf32>
    %35 = tpu.matmul %34, %15, %cst_16 {dimension_numbers = #tpu.dot_dimension_numbers<[1], [0], [0], [1], [0, 0, 1, 1], [], []>} : vector<64x16xf32>, vector<16x32xf32>, vector<64x32xf32> -> vector<64x32xf32>
    %36 = vector.shape_cast %35 : vector<64x32xf32> to vector<4x16x32xf32>
    %37 = vector.broadcast %16 : vector<4x1x32xf32> to vector<4x16x32xf32>
    %38 = arith.mulf %36, %37 : vector<4x16x32xf32>
    %cst_17 = arith.constant dense<0.000000e+00> : vector<16x32xf32>
    %39 = vector.multi_reduction <add>, %38, %cst_17 [0] : vector<4x16x32xf32> to vector<16x32xf32>
    %c0_18 = arith.constant 0 : index
    %c0_19 = arith.constant 0 : index
    %40 = vector.load %arg7[%c0_18, %c0_19] : memref<32x32xf32, #tpu.memory_space<vmem>>, vector<32x32xf32>
    %cst_20 = arith.constant dense<0.000000e+00> : vector<16x32xf32>
    %41 = tpu.matmul %39, %40, %cst_20 {dimension_numbers = #tpu.dot_dimension_numbers<[1], [0], [0], [1], [0, 0, 1, 1], [], []>} : vector<16x32xf32>, vector<32x32xf32>, vector<16x32xf32> -> vector<16x32xf32>
    %c0_21 = arith.constant 0 : index
    %c0_22 = arith.constant 0 : index
    %42 = vector.load %arg8[%c0_21, %c0_22] : memref<1x32xf32, #tpu.memory_space<vmem>>, vector<1x32xf32>
    %43 = vector.broadcast %42 : vector<1x32xf32> to vector<16x32xf32>
    %44 = arith.addf %41, %43 : vector<16x32xf32>
    %c0_23 = arith.constant 0 : index
    %c0_24 = arith.constant 0 : index
    %45 = vector.load %arg9[%c0_23, %c0_24] : memref<16x32xf32, #tpu.memory_space<vmem>>, vector<16x32xf32>
    tpu.vector_store %arg9[%c0_23, %c0_24], %44 {strides = array<i32>} : memref<16x32xf32, #tpu.memory_space<vmem>>, vector<16x32xf32>,
    return
  }
  func.func @transform_0(%arg0: i32) -> (i32, i32) {
    %c0_i32 = arith.constant 0 : i32
    %c0_i32_0 = arith.constant 0 : i32
    %c0_i32_1 = arith.constant 0 : i32
    return %c0_i32, %c0_i32_0 : i32, i32
  }
  func.func @transform_1(%arg0: i32) -> (i32, i32) {
    %c0_i32 = arith.constant 0 : i32
    %c0_i32_0 = arith.constant 0 : i32
    %c0_i32_1 = arith.constant 0 : i32
    return %c0_i32, %c0_i32_0 : i32, i32
  }
  func.func @transform_2(%arg0: i32) -> (i32, i32) {
    %c0_i32 = arith.constant 0 : i32
    %c0_i32_0 = arith.constant 0 : i32
    %c0_i32_1 = arith.constant 0 : i32
    return %c0_i32, %c0_i32_0 : i32, i32
  }
  func.func @transform_3(%arg0: i32) -> (i32, i32) {
    %c0_i32 = arith.constant 0 : i32
    %c0_i32_0 = arith.constant 0 : i32
    %c0_i32_1 = arith.constant 0 : i32
    return %c0_i32, %c0_i32_0 : i32, i32
  }
  func.func @transform_4(%arg0: i32) -> (i32, i32, i32) {
    %c0_i32 = arith.constant 0 : i32
    %c0_i32_0 = arith.constant 0 : i32
    %c0_i32_1 = arith.constant 0 : i32
    %c0_i32_2 = arith.constant 0 : i32
    return %c0_i32, %c0_i32_0, %c0_i32_1 : i32, i32, i32
  }
  func.func @transform_5(%arg0: i32) -> (i32, i32) {
    %c0_i32 = arith.constant 0 : i32
    %c0_i32_0 = arith.constant 0 : i32
    %c0_i32_1 = arith.constant 0 : i32
    return %c0_i32, %c0_i32_0 : i32, i32
  }
  func.func @transform_6(%arg0: i32) -> (i32, i32) {
    %c0_i32 = arith.constant 0 : i32
    %c0_i32_0 = arith.constant 0 : i32
    %c0_i32_1 = arith.constant 0 : i32
    return %c0_i32, %c0_i32_0 : i32, i32
  }
  func.func @transform_7(%arg0: i32) -> (i32, i32) {
    %c0_i32 = arith.constant 0 : i32
    %c0_i32_0 = arith.constant 0 : i32
    %c0_i32_1 = arith.constant 0 : i32
    return %c0_i32, %c0_i32_0 : i32, i32
  }
  func.func @transform_8(%arg0: i32) -> (i32, i32) {
    %c0_i32 = arith.constant 0 : i32
    %c0_i32_0 = arith.constant 0 : i32
    %c0_i32_1 = arith.constant 0 : i32
    return %c0_i32, %c0_i32_0 : i32, i32
  }
}

</mosaic_0001>

<llo_original>
// kernel: coreg_prompt_embedding_forward.1
$region0: #{coreg_prompt_embedding_forward.1}
  #allocation0 [shape = 'u32[]', space=smem, size = 0x4, offset = 0x4, fixed_abs, tag = 'smem constant byte address 0x4 - core index']
  #allocation1 [shape = 'u32[72,128]{1,0:T(1,128)}', space=vmem, size = 0x9000, scoped, tag = 'internal scratch']
  %s0 = inlined_call_operand.vmem [shape: s32[16,1], index: 0, kind: input, shape index: {}]
  %s1 = inlined_call_operand.vmem [shape: f32[8,32], index: 1, kind: input, shape index: {}]
  %s2 = inlined_call_operand.vmem [shape: f32[32,96], index: 2, kind: input, shape index: {}]
  %s3 = inlined_call_operand.vmem [shape: f32[1,96], index: 3, kind: input, shape index: {}]
  %s4 = inlined_call_operand.vmem [shape: f32[4,1,32], index: 4, kind: input, shape index: {}]
  %s5 = inlined_call_operand.vmem [shape: f32[64,16], index: 5, kind: input, shape index: {}]
  %s6 = inlined_call_operand.vmem [shape: f32[32,32], index: 6, kind: input, shape index: {}]
  %s7 = inlined_call_operand.vmem [shape: f32[1,32], index: 7, kind: input, shape index: {}]
  %s8 = inlined_call_operand.hbm [shape: f32[16,32], index: 8, kind: output, shape index: {}]
  %s9 = sld [smem:[#allocation0]]
  $region42: #{coreg_prompt_embedding_forward.1} parent=0
    _
  %s11 = ssub.s32 1, %s9
  %s12 = scalar_select 0, %s11, %s9
  $region1: #{coreg_prompt_embedding_forward.1} parent=0
    #allocation2 [shape = 'u8[8192]{0}', space=vmem, size = 0x2000, scoped, tag = 'output window, operand 0, single buffered']
    #allocation3 [shape = 's32[1]{0}', space=sflag, size = 0x4, scoped, tag = 'scoped memory for coreg_prompt_embedding_forward.1']
    %13 = vsyncpa [#allocation3], 0
    // Predicated region
    $region2: #{coreg_prompt_embedding_forward.1} parent=1 // pred_check
      _
    $region3: #{coreg_prompt_embedding_forward.1} parent=1 // pred_check_branch
      %15 = sbr.rel (0) target = $region5
    $region4: #{coreg_prompt_embedding_forward.1} parent=1 // pred_region
      _
    $region5: #{coreg_prompt_embedding_forward.1} parent=1 // pred_fallthru
      _
    // Predicated region
    $region6: #{coreg_prompt_embedding_forward.1} parent=1 // pred_check
      _
    $region7: #{coreg_prompt_embedding_forward.1} parent=1 // pred_check_branch
      %17 = sbr.rel (0) target = $region9
    $region8: #{coreg_prompt_embedding_forward.1} parent=1 // pred_region
      _
    $region9: #{coreg_prompt_embedding_forward.1} parent=1 // pred_fallthru
      _
    // Predicated region
    $region10: #{coreg_prompt_embedding_forward.1} parent=1 // pred_check
      _
    $region11: #{coreg_prompt_embedding_forward.1} parent=1 // pred_check_branch
      %19 = sbr.rel (0) target = $region13
    $region12: #{coreg_prompt_embedding_forward.1} parent=1 // pred_region
      _
    $region13: #{coreg_prompt_embedding_forward.1} parent=1 // pred_fallthru
      _
    // Predicated region
    $region14: #{coreg_prompt_embedding_forward.1} parent=1 // pred_check
      _
    $region15: #{coreg_prompt_embedding_forward.1} parent=1 // pred_check_branch
      %21 = sbr.rel (0) target = $region17
    $region16: #{coreg_prompt_embedding_forward.1} parent=1 // pred_region
      _
    $region17: #{coreg_prompt_embedding_forward.1} parent=1 // pred_fallthru
      _
    // Predicated region
    $region18: #{coreg_prompt_embedding_forward.1} parent=1 // pred_check
      _
    $region19: #{coreg_prompt_embedding_forward.1} parent=1 // pred_check_branch
      %23 = sbr.rel (0) target = $region21
    $region20: #{coreg_prompt_embedding_forward.1} parent=1 // pred_region
      _
    $region21: #{coreg_prompt_embedding_forward.1} parent=1 // pred_fallthru
      _
    // Predicated region
    $region22: #{coreg_prompt_embedding_forward.1} parent=1 // pred_check
      _
    $region23: #{coreg_prompt_embedding_forward.1} parent=1 // pred_check_branch
      %25 = sbr.rel (0) target = $region25
    $region24: #{coreg_prompt_embedding_forward.1} parent=1 // pred_region
      _
    $region25: #{coreg_prompt_embedding_forward.1} parent=1 // pred_fallthru
      _
    // Predicated region
    $region26: #{coreg_prompt_embedding_forward.1} parent=1 // pred_check
      _
    $region27: #{coreg_prompt_embedding_forward.1} parent=1 // pred_check_branch
      %27 = sbr.rel (0) target = $region29
    $region28: #{coreg_prompt_embedding_forward.1} parent=1 // pred_region
      _
    $region29: #{coreg_prompt_embedding_forward.1} parent=1 // pred_fallthru
      _
    // Predicated region
    $region30: #{coreg_prompt_embedding_forward.1} parent=1 // pred_check
      _
    $region31: #{coreg_prompt_embedding_forward.1} parent=1 // pred_check_branch
      %29 = sbr.rel (0) target = $region33
    $region32: #{coreg_prompt_embedding_forward.1} parent=1 // pred_region
      _
    $region33: #{coreg_prompt_embedding_forward.1} parent=1 // pred_fallthru
      _
    %v30 = vld [vmem:[%s0] sm:$0xff]
    %v31 = vld [vmem:[%s0 + $0x8] sm:$0xff]
    %v32 = vld [vmem:[%s1] sm:$0xff]
    %v33 = vlaneseq
    %v34 = vand.u32 %v33, 127
    %35 = vset.pattern.permute.xlu0 0
    %36 = vperm.xlu0 %35, %v30
    %v37 = vpop.permute.xlu0 %36
    %38 = vset.pattern.permute.xlu0 0
    %39 = vperm.xlu0 %38, %v31
    %v40 = vpop.permute.xlu0 %39
    %vm41 = vcmp.eq.s32.totalorder %v37, %v34
    %vm42 = vcmp.eq.s32.totalorder %v40, %v34
    %v43 = vsel %vm41, 1, 0
    %v44 = vsel %vm42, 1, 0
    %v45 = vcvt.s32.f32 %v43
    %v46 = vcvt.s32.f32 %v44
    %vm47 = vcmask 64512
    %v49 = vsel %vm47, %v45, 0
    %v52 = vsel %vm47, %v46, 0
    %54 = vmatpush.msra.mxu0 0.0
    %55 = vmatpush.msra.mxu0 0.0
    %56 = vmatpush.msra.mxu0 0.0
    %57 = vmatpush.msra.mxu0 0.0
    %58 = vmatpush.msra.mxu0 0.0
    %59 = vmatpush.msra.mxu0 0.0
    %60 = vmatpush.msra.mxu0 0.0
    %61 = vmatpush.msra.mxu0 0.0
    %62 = vmatpush.msra.mxu0 0.0
    %63 = vmatpush.msra.mxu0 0.0
    %64 = vmatpush.msra.mxu0 0.0
    %65 = vmatpush.msra.mxu0 0.0
    %66 = vmatpush.msra.mxu0 0.0
    %67 = vmatpush.msra.mxu0 0.0
    %68 = vmatpush.msra.mxu0 0.0
    %69 = vmatpush.msra.mxu0 %v32
    %70 = vmatmul.f32.gmra.mxu0 %v49
    %v71 = vpop.f32.mrf.mxu0
    %v72 = vadd.f32 0.0, %v71
    %73 = vmatmul.f32.gmra.mxu0 %v52
    %v74 = vpop.f32.mrf.mxu0
    %v75 = vadd.f32 0.0, %v74
    %76 = vdwg.mxu0
    %v77 = vld [vmem:[%s2] sm:$0xff]
    %v78 = vld [vmem:[%s2 + $0x8] sm:$0xff]
    %v79 = vld [vmem:[%s2 + $0x10] sm:$0xff]
    %v80 = vld [vmem:[%s2 + $0x18] sm:$0xff]
    %v81 = vld [vmem:[%s3] sm:$0x1]
    %v83 = vperm.slane %v81, 0
    %vm85 = vcmask 261120
    %v87 = vsel %vm85, %v72, 0
    %v90 = vsel %vm85, %v75, 0
    %92 = vmatpush.msra.mxu0 0.0
    %93 = vmatpush.msra.mxu0 0.0
    %94 = vmatpush.msra.mxu0 0.0
    %95 = vmatpush.msra.mxu0 0.0
    %96 = vmatpush.msra.mxu0 0.0
    %97 = vmatpush.msra.mxu0 0.0
    %98 = vmatpush.msra.mxu0 0.0
    %99 = vmatpush.msra.mxu0 0.0
    %100 = vmatpush.msra.mxu0 0.0
    %101 = vmatpush.msra.mxu0 0.0
    %102 = vmatpush.msra.mxu0 0.0
    %103 = vmatpush.msra.mxu0 0.0
    %104 = vmatpush.msra.mxu0 %v80
    %105 = vmatpush.msra.mxu0 %v79
    %106 = vmatpush.msra.mxu0 %v78
    %107 = vmatpush.msra.mxu0 %v77
    %108 = vmatmul.f32.gmra.mxu0 %v87
    %v109 = vpop.f32.mrf.mxu0
    %v110 = vadd.f32 %v83, %v109
    %111 = vmatmul.f32.gmra.mxu0 %v90
    %v112 = vpop.f32.mrf.mxu0
    %v113 = vadd.f32 %v83, %v112
    %114 = vdwg.mxu0
    %v115 = vld [vmem:[%s4] sm:$0x1]
    %v116 = vld [vmem:[%s4 + $0x1] sm:$0x1]
    %v117 = vld [vmem:[%s4 + $0x2] sm:$0x1]
    %v118 = vld [vmem:[%s4 + $0x3] sm:$0x1]
    %v123 = vperm.slane %v115, 0
    %v124 = vperm.slane %v116, 0
    %v125 = vperm.slane %v117, 0
    %v126 = vperm.slane %v118, 0
    %v131 = vmul.f32 %v110, %v123
    %v132 = vmul.f32 %v113, %v123
    %v133 = vmul.f32 %v110, %v124
    %v134 = vmul.f32 %v113, %v124
    %v135 = vmul.f32 %v110, %v125
    %v136 = vmul.f32 %v113, %v125
    %v137 = vmul.f32 %v110, %v126
    %v138 = vmul.f32 %v113, %v126
    %v139 = vld [vmem:[%s5] sm:$0xff]
    %v140 = vld [vmem:[%s5 + $0x8] sm:$0xff]
    %v141 = vld [vmem:[%s5 + $0x10] sm:$0xff]
    %v142 = vld [vmem:[%s5 + $0x18] sm:$0xff]
    %v143 = vld [vmem:[%s5 + $0x20] sm:$0xff]
    %v144 = vld [vmem:[%s5 + $0x28] sm:$0xff]
    %v145 = vld [vmem:[%s5 + $0x30] sm:$0xff]
    %v146 = vld [vmem:[%s5 + $0x38] sm:$0xff]
    %149 = vrot.lane.b32.xlu0 %v110, 96
    %v150 = vpop.permute.xlu0 %149
    %151 = vrot.lane.b32.xlu0 %v113, 96
    %v152 = vpop.permute.xlu0 %151
    %v154 = vsel %vm85, %v131, 0
    %v157 = vsel %vm85, %v132, 0
    %v160 = vsel %vm85, %v133, 0
    %v163 = vsel %vm85, %v134, 0
    %v166 = vsel %vm85, %v135, 0
    %v169 = vsel %vm85, %v136, 0
    %v172 = vsel %vm85, %v137, 0
    %v175 = vsel %vm85, %v138, 0
    %v177 = vsel %vm85, %v150, 0
    %v179 = vsel %vm85, %v152, 0
    %181 = vmatpush.xpose.msra.mxu0 0.0
    %182 = vmatpush.xpose.msra.mxu0 0.0
    %183 = vmatpush.xpose.msra.mxu0 0.0
    %184 = vmatpush.xpose.msra.mxu0 0.0
    %185 = vmatpush.xpose.msra.mxu0 0.0
    %186 = vmatpush.xpose.msra.mxu0 0.0
    %187 = vmatpush.xpose.msra.mxu0 0.0
    %188 = vmatpush.xpose.msra.mxu0 0.0
    %189 = vmatpush.xpose.msra.mxu0 0.0
    %190 = vmatpush.xpose.msra.mxu0 0.0
    %191 = vmatpush.xpose.msra.mxu0 0.0
    %192 = vmatpush.xpose.msra.mxu0 0.0
    %193 = vmatpush.xpose.msra.mxu0 0.0
    %194 = vmatpush.xpose.msra.mxu0 0.0
    %195 = vmatpush.xpose.msra.mxu0 %v179
    %196 = vmatpush.xpose.msra.mxu0 %v177
    %197 = vmatmul.f32.gmra.mxu0 %v154
    %v198 = vpop.f32.mrf.mxu0
    %v199 = vadd.f32 %v139, %v198
    %200 = vmatmul.f32.gmra.mxu0 %v157
    %v201 = vpop.f32.mrf.mxu0
    %v202 = vadd.f32 %v140, %v201
    %203 = vmatmul.f32.gmra.mxu0 %v160
    %v204 = vpop.f32.mrf.mxu0
    %v205 = vadd.f32 %v141, %v204
    %206 = vmatmul.f32.gmra.mxu0 %v163
    %v207 = vpop.f32.mrf.mxu0
    %v208 = vadd.f32 %v142, %v207
    %209 = vmatmul.f32.gmra.mxu0 %v166
    %v210 = vpop.f32.mrf.mxu0
    %v211 = vadd.f32 %v143, %v210
    %212 = vmatmul.f32.gmra.mxu0 %v169
    %v213 = vpop.f32.mrf.mxu0
    %v214 = vadd.f32 %v144, %v213
    %215 = vmatmul.f32.gmra.mxu0 %v172
    %v216 = vpop.f32.mrf.mxu0
    %v217 = vadd.f32 %v145, %v216
    %218 = vmatmul.f32.gmra.mxu0 %v175
    %v219 = vpop.f32.mrf.mxu0
    %v220 = vadd.f32 %v146, %v219
    %221 = vdwg.mxu0
    %vm222 = vcmask 130048
    %v223 = vsel %vm222, %v199, -inf
    %224 = vmax.xlane.f32.xlu0 %v223
    %v225 = vpop.xlane.xlu0 %224
    %v226 = vsel %vm222, %v202, -inf
    %227 = vmax.xlane.f32.xlu0 %v226
    %v228 = vpop.xlane.xlu0 %227
    %v229 = vsel %vm222, %v205, -inf
    %230 = vmax.xlane.f32.xlu0 %v229
    %v231 = vpop.xlane.xlu0 %230
    %v232 = vsel %vm222, %v208, -inf
    %233 = vmax.xlane.f32.xlu0 %v232
    %v234 = vpop.xlane.xlu0 %233
    %v235 = vsel %vm222, %v211, -inf
    %236 = vmax.xlane.f32.xlu0 %v235
    %v237 = vpop.xlane.xlu0 %236
    %v238 = vsel %vm222, %v214, -inf
    %239 = vmax.xlane.f32.xlu0 %v238
    %v240 = vpop.xlane.xlu0 %239
    %v241 = vsel %vm222, %v217, -inf
    %242 = vmax.xlane.f32.xlu0 %v241
    %v243 = vpop.xlane.xlu0 %242
    %v244 = vsel %vm222, %v220, -inf
    %245 = vmax.xlane.f32.xlu0 %v244
    %v246 = vpop.xlane.xlu0 %245
    %v247 = vsub.f32 %v199, %v225
    %v248 = vsub.f32 %v202, %v228
    %v249 = vsub.f32 %v205, %v231
    %v250 = vsub.f32 %v208, %v234
    %v251 = vsub.f32 %v211, %v237
    %v252 = vsub.f32 %v214, %v240
    %v253 = vsub.f32 %v217, %v243
    %v254 = vsub.f32 %v220, %v246
    %v255 = vmul.f32 %v247, 1.442695
    %v256 = vpow.pop %v255
    %v257 = vmul.f32 %v248, 1.442695
    %v258 = vpow.pop %v257
    %v259 = vmul.f32 %v249, 1.442695
    %v260 = vpow.pop %v259
    %v261 = vmul.f32 %v250, 1.442695
    %v262 = vpow.pop %v261
    %v263 = vmul.f32 %v251, 1.442695
    %v264 = vpow.pop %v263
    %v265 = vmul.f32 %v252, 1.442695
    %v266 = vpow.pop %v265
    %v267 = vmul.f32 %v253, 1.442695
    %v268 = vpow.pop %v267
    %v269 = vmul.f32 %v254, 1.442695
    %v270 = vpow.pop %v269
    %v271 = vsel %vm222, %v256, 0.0
    %272 = vadd.xlane.f32.xlu0 %v271
    %v273 = vpop.xlane.xlu0 %272
    %v274 = vsel %vm222, %v258, 0.0
    %275 = vadd.xlane.f32.xlu0 %v274
    %v276 = vpop.xlane.xlu0 %275
    %v277 = vsel %vm222, %v260, 0.0
    %278 = vadd.xlane.f32.xlu0 %v277
    %v279 = vpop.xlane.xlu0 %278
    %v280 = vsel %vm222, %v262, 0.0
    %281 = vadd.xlane.f32.xlu0 %v280
    %v282 = vpop.xlane.xlu0 %281
    %v283 = vsel %vm222, %v264, 0.0
    %284 = vadd.xlane.f32.xlu0 %v283
    %v285 = vpop.xlane.xlu0 %284
    %v286 = vsel %vm222, %v266, 0.0
    %287 = vadd.xlane.f32.xlu0 %v286
    %v288 = vpop.xlane.xlu0 %287
    %v289 = vsel %vm222, %v268, 0.0
    %290 = vadd.xlane.f32.xlu0 %v289
    %v291 = vpop.xlane.xlu0 %290
    %v292 = vsel %vm222, %v270, 0.0
    %293 = vadd.xlane.f32.xlu0 %v292
    %v294 = vpop.xlane.xlu0 %293
    %v295 = vrcp.pop %v273
    %v296 = vrcp.pop %v276
    %v297 = vrcp.pop %v279
    %v298 = vrcp.pop %v282
    %v299 = vrcp.pop %v285
    %v300 = vrcp.pop %v288
    %v301 = vrcp.pop %v291
    %v302 = vrcp.pop %v294
    %v303 = vmul.f32 %v256, %v295
    %v304 = vmul.f32 %v258, %v296
    %v305 = vmul.f32 %v260, %v297
    %v306 = vmul.f32 %v262, %v298
    %v307 = vmul.f32 %v264, %v299
    %v308 = vmul.f32 %v266, %v300
    %v309 = vmul.f32 %v268, %v301
    %v310 = vmul.f32 %v270, %v302
    %311 = vrot.lane.b32.xlu0 %v110, 64
    %v312 = vpop.permute.xlu0 %311
    %313 = vrot.lane.b32.xlu0 %v113, 64
    %v314 = vpop.permute.xlu0 %313
    %v318 = vsel %vm222, %v303, 0
    %v321 = vsel %vm222, %v304, 0
    %v324 = vsel %vm222, %v305, 0
    %v327 = vsel %vm222, %v306, 0
    %v330 = vsel %vm222, %v307, 0
    %v333 = vsel %vm222, %v308, 0
    %v336 = vsel %vm222, %v309, 0
    %v339 = vsel %vm222, %v310, 0
    %341 = vmatpush.msra.mxu0 0.0
    %342 = vmatpush.msra.mxu0 0.0
    %343 = vmatpush.msra.mxu0 0.0
    %344 = vmatpush.msra.mxu0 0.0
    %345 = vmatpush.msra.mxu0 0.0
    %346 = vmatpush.msra.mxu0 0.0
    %347 = vmatpush.msra.mxu0 0.0
    %348 = vmatpush.msra.mxu0 0.0
    %349 = vmatpush.msra.mxu0 0.0
    %350 = vmatpush.msra.mxu0 0.0
    %351 = vmatpush.msra.mxu0 0.0
    %352 = vmatpush.msra.mxu0 0.0
    %353 = vmatpush.msra.mxu0 0.0
    %354 = vmatpush.msra.mxu0 0.0
    %355 = vmatpush.msra.mxu0 %v314
    %356 = vmatpush.msra.mxu0 %v312
    %357 = vmatmul.f32.gmra.mxu0 %v318
    %v358 = vpop.f32.mrf.mxu0
    %v359 = vadd.f32 0.0, %v358
    %360 = vmatmul.f32.gmra.mxu0 %v321
    %v361 = vpop.f32.mrf.mxu0
    %v362 = vadd.f32 0.0, %v361
    %363 = vmatmul.f32.gmra.mxu0 %v324
    %v364 = vpop.f32.mrf.mxu0
    %v365 = vadd.f32 0.0, %v364
    %366 = vmatmul.f32.gmra.mxu0 %v327
    %v367 = vpop.f32.mrf.mxu0
    %v368 = vadd.f32 0.0, %v367
    %369 = vmatmul.f32.gmra.mxu0 %v330
    %v370 = vpop.f32.mrf.mxu0
    %v371 = vadd.f32 0.0, %v370
    %372 = vmatmul.f32.gmra.mxu0 %v333
    %v373 = vpop.f32.mrf.mxu0
    %v374 = vadd.f32 0.0, %v373
    %375 = vmatmul.f32.gmra.mxu0 %v336
    %v376 = vpop.f32.mrf.mxu0
    %v377 = vadd.f32 0.0, %v376
    %378 = vmatmul.f32.gmra.mxu0 %v339
    %v379 = vpop.f32.mrf.mxu0
    %v380 = vadd.f32 0.0, %v379
    %381 = vdwg.mxu0
    %v382 = vmul.f32 %v359, %v123
    %v383 = vmul.f32 %v362, %v123
    %v384 = vmul.f32 %v365, %v124
    %v385 = vmul.f32 %v368, %v124
    %v386 = vmul.f32 %v371, %v125
    %v387 = vmul.f32 %v374, %v125
    %v388 = vmul.f32 %v377, %v126
    %v389 = vmul.f32 %v380, %v126
    %v390 = vsel %vm85, %v382, 0.0
    %v391 = vsel %vm85, %v384, 0.0
    %v392 = vadd.f32 %v390, %v391
    %v393 = vsel %vm85, %v386, 0.0
    %v394 = vadd.f32 %v392, %v393
    %v395 = vsel %vm85, %v388, 0.0
    %v396 = vadd.f32 %v394, %v395
    %v397 = vsel %vm85, %v383, 0.0
    %v398 = vsel %vm85, %v385, 0.0
    %v399 = vadd.f32 %v397, %v398
    %v400 = vsel %vm85, %v387, 0.0
    %v401 = vadd.f32 %v399, %v400
    %v402 = vsel %vm85, %v389, 0.0
    %v403 = vadd.f32 %v401, %v402
    %v404 = vld [vmem:[%s6] sm:$0xff]
    %v405 = vld [vmem:[%s6 + $0x8] sm:$0xff]
    %v406 = vld [vmem:[%s6 + $0x10] sm:$0xff]
    %v407 = vld [vmem:[%s6 + $0x18] sm:$0xff]
    %v408 = vld [vmem:[%s7] sm:$0x1]
    %v410 = vperm.slane %v408, 0
    %v413 = vsel %vm85, %v396, 0
    %v416 = vsel %vm85, %v403, 0
    %418 = vmatpush.msra.mxu0 0.0
    %419 = vmatpush.msra.mxu0 0.0
    %420 = vmatpush.msra.mxu0 0.0
    %421 = vmatpush.msra.mxu0 0.0
    %422 = vmatpush.msra.mxu0 0.0
    %423 = vmatpush.msra.mxu0 0.0
    %424 = vmatpush.msra.mxu0 0.0
    %425 = vmatpush.msra.mxu0 0.0
    %426 = vmatpush.msra.mxu0 0.0
    %427 = vmatpush.msra.mxu0 0.0
    %428 = vmatpush.msra.mxu0 0.0
    %429 = vmatpush.msra.mxu0 0.0
    %430 = vmatpush.msra.mxu0 %v407
    %431 = vmatpush.msra.mxu0 %v406
    %432 = vmatpush.msra.mxu0 %v405
    %433 = vmatpush.msra.mxu0 %v404
    %434 = vmatmul.f32.gmra.mxu0 %v413
    %v435 = vpop.f32.mrf.mxu0
    %v436 = vadd.f32 %v410, %v435
    %437 = vmatmul.f32.gmra.mxu0 %v416
    %v438 = vpop.f32.mrf.mxu0
    %v439 = vadd.f32 %v410, %v438
    %440 = vdwg.mxu0
    %441 = vst.msk [vmem:[#allocation2] sm:$0xff] %vm85, %v436
    %442 = vst.msk [vmem:[#allocation2 + $0x8] sm:$0xff] %vm85, %v439
    // Predicated region
    $region34: #{coreg_prompt_embedding_forward.1} parent=1 // pred_check
      _
    $region35: #{coreg_prompt_embedding_forward.1} parent=1 // pred_check_branch
      %444 = sbr.rel (0) target = $region37
    $region36: #{coreg_prompt_embedding_forward.1} parent=1 // pred_region
      %446 = vsyncadd [#allocation3], 0
      %s447 = sshll.u32 [#allocation2], 4
      %s448 = int_to_ptr.vmem [resolvable:$true] %s447
      %s449 = sshll.u32 %s8, 4
      %s450 = int_to_ptr.hbm [resolvable:$true] %s449
      %455 = dma.vmem_to_hbm [thread:$0]  %s448, 256, %s450, [#allocation3], 128, 128, 8
    $region37: #{coreg_prompt_embedding_forward.1} parent=1 // pred_fallthru
      _
    // Predicated region
    $region38: #{coreg_prompt_embedding_forward.1} parent=1 // pred_check
      _
    $region39: #{coreg_prompt_embedding_forward.1} parent=1 // pred_check_branch
      %457 = sbr.rel (0) target = $region41
    $region40: #{coreg_prompt_embedding_forward.1} parent=1 // pred_region
      %459 = dma.done [#allocation3], 256
    $region41: #{coreg_prompt_embedding_forward.1} parent=1 // pred_fallthru
      _
    %460 = vsyncpa [#allocation3], 1

</llo_original>
